<compile_context>
chip_gen: v7x
topology: tpu7x:2x2x1
jax: 0.10.0
libtpu: 0.0.40
codegen_flags: <defaults>
</compile_context>

<pallas_src>
import functools

import jax
import jax.numpy as jnp
from jax import lax
from jax.experimental import pallas as pl
from jax.experimental.pallas import tpu as pltpu


def _round_up(x, m):
    return (x + m - 1) // m * m


def _pick_tile(dim, cap, base):
    """Largest divisor of `dim` that is <= cap and a multiple of `base`.
    `dim` is assumed to already be padded to a multiple of `base`."""
    t = min(dim, cap)
    t -= t % base
    if t <= 0:
        return dim
    while dim % t:
        t -= base
    return t


def _num_parallel_batch_tiles():
    """Number of batch tiles for the recurrence: 2 on v7x (2 TensorCores/chip), else 1.
    Splitting the batch on a 1-TC chip only re-runs the time loop with a smaller matmul M."""
    try:
        kind = jax.devices()[0].device_kind.lower()
    except Exception:
        return 1
    return 2 if "7" in kind else 1


def _vmem_limit_bytes(working_set_bytes):
    """Raise the scoped-VMEM limit when the pipelined working set needs it, but stay
    comfortably below the smallest physical VMEM (64 MiB per TensorCore on v7x)."""
    return int(min(56 * 1024 * 1024, max(32 * 1024 * 1024, working_set_bytes * 3 // 2)))


def _sigmoid(x):
    # exp on the EUP + approximate reciprocal on the EUP: keeps the divide out of the
    # VALU slot, which becomes the likely binder once the batch tile is large.
    return pl.reciprocal(1.0 + jnp.exp(-x), approx=True)


# ---------------------------------------------------------------------------
# Kernel A: tiled matmul + bias (bf16 operands, f32 accumulation).
# Used for the hoisted input projection and the vocab/fc projection.
# ---------------------------------------------------------------------------
def _matmul_bias_kernel(x_ref, w_ref, b_ref, o_ref, acc_ref):
    @pl.when(pl.program_id(2) == 0)
    def _init():
        acc_ref[...] = jnp.zeros_like(acc_ref)

    acc_ref[...] += jnp.dot(x_ref[...], w_ref[...],
                            preferred_element_type=jnp.float32)

    @pl.when(pl.program_id(2) == pl.num_programs(2) - 1)
    def _finish():
        o_ref[...] = (acc_ref[...] + b_ref[...]).astype(o_ref.dtype)


def matmul_bias(x, w, b, *, out_dtype=jnp.float32, tm_cap=256, tn_cap=512, tk_cap=512):
    """x: (M, K), w: (K, N), b: (1, N) f32 -> (M, N) out_dtype.
    Requires M % 8 == 0, K % 128 == 0, N % 128 == 0 (caller pads)."""
    M, K = x.shape
    _, N = w.shape
    tm = _pick_tile(M, tm_cap, 8)
    tn = _pick_tile(N, tn_cap, 128)   # N tiled lane-dense; W never fully resident
    tk = _pick_tile(K, tk_cap, 128)
    grid = (M // tm, N // tn, K // tk)

    xb, wb, ob = x.dtype.itemsize, w.dtype.itemsize, jnp.dtype(out_dtype).itemsize
    cost = pl.CostEstimate(flops=2 * M * N * K + M * N,
                           transcendentals=0,
                           bytes_accessed=xb * M * K + wb * K * N + 4 * N + ob * M * N)
    working_set = (2 * (tm * tk * xb + tk * tn * wb + tm * tn * ob)
                   + 2 * tn * 4 + tm * tn * 4)

    return pl.pallas_call(
        _matmul_bias_kernel,
        out_shape=jax.ShapeDtypeStruct((M, N), out_dtype),
        grid=grid,
        in_specs=[
            pl.BlockSpec((tm, tk), lambda i, j, k: (i, k)),
            pl.BlockSpec((tk, tn), lambda i, j, k: (k, j)),
            pl.BlockSpec((1, tn), lambda i, j, k: (0, j)),
        ],
        out_specs=pl.BlockSpec((tm, tn), lambda i, j, k: (i, j)),
        scratch_shapes=[pltpu.VMEM((tm, tn), jnp.float32)],
        compiler_params=pltpu.CompilerParams(
            dimension_semantics=("parallel", "parallel", "arbitrary"),
            vmem_limit_bytes=_vmem_limit_bytes(working_set)),
        cost_estimate=cost,
    )(x, w, b)


# ---------------------------------------------------------------------------
# Kernel B: the LSTM recurrence.  Grid is "parallel" over (few, large) batch tiles,
# time is an in-kernel fori_loop; the precomputed per-step input gates (gx) are
# VMEM-resident per batch tile; only h @ W_hh is serial.
# ---------------------------------------------------------------------------
def _lstm_recurrence_kernel(gx_ref, whh_ref, h_out_ref, *, hidden, seq_len, unroll):
    H = hidden
    bt = gx_ref.shape[1]
    w_hh = whh_ref[...]                 # (Hp, 4Hp) bf16, loaded once outside the loop

    def step(t, carry):
        h, c = carry                    # f32 carries (accuracy over long T)
        gates = gx_ref[t].astype(jnp.float32) + jnp.dot(
            h.astype(jnp.bfloat16), w_hh, preferred_element_type=jnp.float32)
        # H is padded to a multiple of 128 -> every gate slice below is lane-aligned.
        i_g = _sigmoid(gates[:, 0 * H:1 * H])
        f_g = _sigmoid(gates[:, 1 * H:2 * H])
        g_g = jnp.tanh(gates[:, 2 * H:3 * H])
        o_g = _sigmoid(gates[:, 3 * H:4 * H])
        c_new = f_g * c + i_g * g_g
        h_new = o_g * jnp.tanh(c_new)
        h_out_ref[t] = h_new.astype(h_out_ref.dtype)
        return h_new, c_new

    init = (jnp.zeros((bt, H), jnp.float32), jnp.zeros((bt, H), jnp.float32))
    lax.fori_loop(0, seq_len, step, init, unroll=unroll)


def lstm_recurrence(gx, w_hh, *, batch_tile, unroll=2, out_dtype=jnp.bfloat16):
    """gx: (T, Bp, 4Hp) bf16 precomputed X@W_ih + b; w_hh: (Hp, 4Hp) bf16 -> (T, Bp, Hp)."""
    T, Bp, G4 = gx.shape
    Hp = w_hh.shape[0]
    bt = batch_tile
    assert Bp % bt == 0 and bt % 8 == 0

    ob = jnp.dtype(out_dtype).itemsize
    # W_hh index_map is constant but is still double-buffered; bf16 halves its footprint.
    # TODO(synk): use pipeline_mode=pl.Buffered(1) on the W_hh BlockSpec once single-buffer
    # pipeline modes are supported in the target jax release (saves one W_hh copy on v7x).
    working_set = (2 * T * bt * G4 * gx.dtype.itemsize
                   + 2 * Hp * G4 * w_hh.dtype.itemsize
                   + 2 * T * bt * Hp * ob)
    cost = pl.CostEstimate(flops=2 * T * Bp * Hp * G4 + 12 * T * Bp * Hp,
                           transcendentals=8 * T * Bp * Hp,
                           bytes_accessed=gx.dtype.itemsize * T * Bp * G4
                           + w_hh.dtype.itemsize * Hp * G4 + ob * T * Bp * Hp)

    return pl.pallas_call(
        functools.partial(_lstm_recurrence_kernel,
                          hidden=Hp, seq_len=T, unroll=unroll),
        out_shape=jax.ShapeDtypeStruct((T, Bp, Hp), out_dtype),
        grid=(Bp // bt,),
        in_specs=[
            pl.BlockSpec((T, bt, G4), lambda b: (0, b, 0)),   # per-batch-tile input gates
            pl.BlockSpec((Hp, G4), lambda b: (0, 0)),          # W_hh resident
        ],
        out_specs=pl.BlockSpec((T, bt, Hp), lambda b: (0, b, 0)),
        compiler_params=pltpu.CompilerParams(
            dimension_semantics=("parallel",),                 # one tile per TensorCore
            vmem_limit_bytes=_vmem_limit_bytes(working_set)),
        cost_estimate=cost,
    )(gx, w_hh)


class DecoderRNNPallas:
    """JAX/Pallas re-implementation of the PyTorch DecoderRNN forward pass."""

    def __init__(self, embed_size, hidden_size, vocab_size, num_layers=1, key=None):
        assert num_layers == 1, "kernel implements the default single-layer LSTM"
        self.embed_size = embed_size
        self.hidden_size = hidden_size
        self.vocab_size = vocab_size
        self.n_parallel_tiles = _num_parallel_batch_tiles()
        if key is None:
            key = jax.random.PRNGKey(0)
        k_emb, k_wih, k_whh, k_bih, k_bhh, k_wfc, k_bfc = jax.random.split(key, 7)

        H, E, V = hidden_size, embed_size, vocab_size
        s = 1.0 / jnp.sqrt(jnp.float32(H))
        # nn.Embedding default init: N(0, 1)
        self.embedding = jax.random.normal(k_emb, (V, E), jnp.float32)
        # nn.LSTM default init: U(-1/sqrt(H), 1/sqrt(H)); stored transposed, gate order i,f,g,o.
        self.w_ih = jax.random.uniform(k_wih, (E, 4 * H), jnp.float32, -s, s)
        self.w_hh = jax.random.uniform(k_whh, (H, 4 * H), jnp.float32, -s, s)
        b_ih = jax.random.uniform(k_bih, (4 * H,), jnp.float32, -s, s)
        b_hh = jax.random.uniform(k_bhh, (4 * H,), jnp.float32, -s, s)
        self.b = (b_ih + b_hh).reshape(1, 4 * H)
        # nn.Linear default init: U(-1/sqrt(H), 1/sqrt(H))
        self.w_fc = jax.random.uniform(k_wfc, (H, V), jnp.float32, -s, s)
        self.b_fc = jax.random.uniform(k_bfc, (1, V), jnp.float32, -s, s)

        # ---- lane/sublane-aligned padded copies used by the kernels ----------------
        # Padded gate columns have zero weights and zero bias, so padded hidden/cell
        # entries stay exactly 0 through the recurrence (sigmoid(0)*0 terms), and the
        # zero-padded W_fc rows contribute nothing to the logits.
        self.E_pad = _round_up(E, 128)
        self.H_pad = _round_up(H, 128)
        self.V_pad = _round_up(V, 128)

        def pad_gate_cols(a, h, hp):
            parts = []
            for g in range(4):
                blk = a[..., g * h:(g + 1) * h]
                parts.append(jnp.pad(blk, [(0, 0)] * (a.ndim - 1) + [(0, hp - h)]))
            return jnp.concatenate(parts, axis=-1)

        # bf16 matmul operands (native MXU path), f32 biases / accumulation.
        self.w_ih_p = pad_gate_cols(
            jnp.pad(self.w_ih, ((0, self.E_pad - E), (0, 0))), H, self.H_pad
        ).astype(jnp.bfloat16)
        self.w_hh_p = pad_gate_cols(
            jnp.pad(self.w_hh, ((0, self.H_pad - H), (0, 0))), H, self.H_pad
        ).astype(jnp.bfloat16)
        self.b_p = pad_gate_cols(self.b, H, self.H_pad)                       # f32
        self.w_fc_p = jnp.pad(
            self.w_fc, ((0, self.H_pad - H), (0, self.V_pad - V))).astype(jnp.bfloat16)
        self.b_fc_p = jnp.pad(self.b_fc, ((0, 0), (0, self.V_pad - V)))       # f32

    def forward(self, features, captions):
        """features: (B, E) float32, captions: (B, L) int32 -> logits (B, L, V)."""
        B = features.shape[0]
        # Glue (embedding gather + concat + transpose) stays in plain JAX.
        captions_embed = jnp.take(self.embedding, captions[:, :-1], axis=0)         # (B, L-1, E)
        caption = jnp.concatenate([features[:, None, :], captions_embed], axis=1)   # (B, T, E)
        T = caption.shape[1]
        x_seq = jnp.transpose(caption, (1, 0, 2))                                   # (T, B, E)

        # Batch tiling for the recurrence: one tile per TensorCore, as large as possible
        # (cap 256) so the per-step (bt, Hp)@(Hp, 4Hp) matmul fills the MXU.
        bt = min(256, _round_up(-(-B // self.n_parallel_tiles), 8))
        Bp = _round_up(B, bt)

        x_seq_p = jnp.pad(
            x_seq, ((0, 0), (0, Bp - B), (0, self.E_pad - self.embed_size))
        ).astype(jnp.bfloat16)

        # 1) Hoisted input projection: one large MXU-efficient matmul for the whole sequence.
        #    Emitted in bf16 to keep the recurrence's per-tile gx block small (v7x VMEM).
        gx = matmul_bias(x_seq_p.reshape(T * Bp, self.E_pad), self.w_ih_p, self.b_p,
                         out_dtype=jnp.bfloat16)
        gx = gx.reshape(T, Bp, 4 * self.H_pad)

        # 2) Sequential LSTM recurrence (only h @ W_hh on the serial critical path).
        h_all = lstm_recurrence(gx, self.w_hh_p, batch_tile=bt, unroll=2)            # (T,Bp,Hp) bf16

        # 3) Parallel vocab projection.  Reorder the (V/H)x-smaller h_all to batch-major so
        #    the matmul writes logits directly in (B, T, V) order -- no full-logits transpose.
        h_bt = jnp.transpose(h_all, (1, 0, 2)).reshape(Bp * T, self.H_pad)
        logits = matmul_bias(h_bt, self.w_fc_p, self.b_fc_p, out_dtype=jnp.float32,
                             tn_cap=1024, tk_cap=self.H_pad)
        logits = logits.reshape(Bp, T, self.V_pad)

        # Drop padding; already in PyTorch's (B, T, V) order.
        return logits[:B, :, :self.vocab_size]


def _reference_forward(model, features, captions):
    """Pure-JAX f32 reference (lax.scan LSTM, unpadded weights) for correctness checking."""
    captions_embed = jnp.take(model.embedding, captions[:, :-1], axis=0)
    caption = jnp.concatenate([features[:, None, :], captions_embed], axis=1)
    x_seq = jnp.transpose(caption, (1, 0, 2))
    H = model.hidden_size
    B = features.shape[0]

    def step(carry, x_t):
        h, c = carry
        gates = x_t @ model.w_ih + h @ model.w_hh + model.b
        i = jax.nn.sigmoid(gates[:, 0 * H:1 * H])
        f = jax.nn.sigmoid(gates[:, 1 * H:2 * H])
        g = jnp.tanh(gates[:, 2 * H:3 * H])
        o = jax.nn.sigmoid(gates[:, 3 * H:4 * H])
        c = f * c + i * g
        h = o * jnp.tanh(c)
        return (h, c), h @ model.w_fc + model.b_fc

    init = (jnp.zeros((B, H), jnp.float32), jnp.zeros((B, H), jnp.float32))
    _, out = jax.lax.scan(step, init, x_seq)
    return jnp.transpose(out, (1, 0, 2))


if __name__ == "__main__":
    embed_size, hidden_size, vocab_size = 32, 32, 64
    B, cap_len = 2, 9   # LSTM sequence length T = 9 (features + 8 embedded tokens)

    key = jax.random.PRNGKey(0)
    k_feat, k_cap, k_params = jax.random.split(key, 3)
    features = jax.random.normal(k_feat, (B, embed_size), jnp.float32)
    captions = jax.random.randint(k_cap, (B, cap_len), 0, vocab_size, jnp.int32)

    model = DecoderRNNPallas(embed_size, hidden_size, vocab_size, num_layers=1, key=k_params)

    out = jax.block_until_ready(model.forward(features, captions))
    ref = jax.block_until_ready(_reference_forward(model, features, captions))

    assert out.shape == (B, cap_len, vocab_size), out.shape
    # bf16 operands + approx-EUP sigmoid vs f32 reference: loosened tolerance.
    err = float(jnp.max(jnp.abs(out - ref)))
    assert err < 6e-2, err

    print("KERNEL_OK")
</pallas_src>

<mosaic_0001>
module attributes {stable_mosaic.version = 11 : i64} {
  func.func @_matmul_bias_kernel(%arg0: i32, %arg1: i32, %arg2: i32, %arg3: memref<72x128xbf16, #tpu.memory_space<vmem>>, %arg4: memref<128x512xbf16, #tpu.memory_space<vmem>>, %arg5: memref<1x512xf32, #tpu.memory_space<vmem>>, %arg6: memref<72x512xbf16, #tpu.memory_space<vmem>>, %arg7: memref<72x512xf32, #tpu.memory_space<vmem>>) attributes {dimension_semantics = [#tpu.dimension_semantics<parallel>, #tpu.dimension_semantics<parallel>, #tpu.dimension_semantics<arbitrary>], iteration_bounds = array<i64: 1, 1, 1>, scalar_prefetch = 0 : i64, scratch_operands = 1 : i64, tpu.core_type = #tpu.core_type<tc>, window_params = [{transform_indices = @transform_0, window_bounds = array<i64: 72, 128>}, {transform_indices = @transform_1, window_bounds = array<i64: 128, 512>}, {transform_indices = @transform_2, window_bounds = array<i64: 1, 512>}, {transform_indices = @transform_3, window_bounds = array<i64: 72, 512>}]} {
    %c0_i32 = arith.constant 0 : i32
    %0 = arith.cmpi eq, %arg2, %c0_i32 : i32
    %1 = arith.extui %0 : i1 to i32
    %c0_i32_0 = arith.constant 0 : i32
    %2 = arith.cmpi ne, %1, %c0_i32_0 : i32
    scf.if %2 {
      %cst_10 = arith.constant 0.000000e+00 : f32
      %12 = vector.broadcast %cst_10 : f32 to vector<72x512xf32>
      %c0_11 = arith.constant 0 : index
      %c0_12 = arith.constant 0 : index
      %13 = vector.load %arg7[%c0_11, %c0_12] : memref<72x512xf32, #tpu.memory_space<vmem>>, vector<72x512xf32>
      tpu.vector_store %arg7[%c0_11, %c0_12], %12 {strides = array<i32>} : memref<72x512xf32, #tpu.memory_space<vmem>>, vector<72x512xf32>,
    } else {
    }
    %c0 = arith.constant 0 : index
    %c0_1 = arith.constant 0 : index
    %3 = vector.load %arg7[%c0, %c0_1] : memref<72x512xf32, #tpu.memory_space<vmem>>, vector<72x512xf32>
    %c0_2 = arith.constant 0 : index
    %c0_3 = arith.constant 0 : index
    %4 = vector.load %arg3[%c0_2, %c0_3] : memref<72x128xbf16, #tpu.memory_space<vmem>>, vector<72x128xbf16>
    %c0_4 = arith.constant 0 : index
    %c0_5 = arith.constant 0 : index
    %5 = vector.load %arg4[%c0_4, %c0_5] : memref<128x512xbf16, #tpu.memory_space<vmem>>, vector<128x512xbf16>
    %cst = arith.constant dense<0.000000e+00> : vector<72x512xf32>
    %6 = tpu.matmul %4, %5, %cst {dimension_numbers = #tpu.dot_dimension_numbers<[1], [0], [0], [1], [0, 0, 1, 1], [], []>} : vector<72x128xbf16>, vector<128x512xbf16>, vector<72x512xf32> -> vector<72x512xf32>
    %7 = arith.addf %3, %6 : vector<72x512xf32>
    %c0_6 = arith.constant 0 : index
    %c0_7 = arith.constant 0 : index
    %8 = vector.load %arg7[%c0_6, %c0_7] : memref<72x512xf32, #tpu.memory_space<vmem>>, vector<72x512xf32>
    tpu.vector_store %arg7[%c0_6, %c0_7], %7 {strides = array<i32>} : memref<72x512xf32, #tpu.memory_space<vmem>>, vector<72x512xf32>,
    %c0_i32_8 = arith.constant 0 : i32
    %9 = arith.cmpi eq, %arg2, %c0_i32_8 : i32
    %10 = arith.extui %9 : i1 to i32
    %c0_i32_9 = arith.constant 0 : i32
    %11 = arith.cmpi ne, %10, %c0_i32_9 : i32
    scf.if %11 {
      %c0_10 = arith.constant 0 : index
      %c0_11 = arith.constant 0 : index
      %12 = vector.load %arg7[%c0_10, %c0_11] : memref<72x512xf32, #tpu.memory_space<vmem>>, vector<72x512xf32>
      %c0_12 = arith.constant 0 : index
      %c0_13 = arith.constant 0 : index
      %13 = vector.load %arg5[%c0_12, %c0_13] : memref<1x512xf32, #tpu.memory_space<vmem>>, vector<1x512xf32>
      %14 = vector.broadcast %13 : vector<1x512xf32> to vector<72x512xf32>
      %15 = arith.addf %12, %14 : vector<72x512xf32>
      %16 = arith.truncf %15 : vector<72x512xf32> to vector<72x512xbf16>
      %c0_14 = arith.constant 0 : index
      %c0_15 = arith.constant 0 : index
      %17 = vector.load %arg6[%c0_14, %c0_15] : memref<72x512xbf16, #tpu.memory_space<vmem>>, vector<72x512xbf16>
      tpu.vector_store %arg6[%c0_14, %c0_15], %16 {strides = array<i32>} : memref<72x512xbf16, #tpu.memory_space<vmem>>, vector<72x512xbf16>,
    } else {
    }
    return
  }
  func.func @transform_0(%arg0: i32, %arg1: i32, %arg2: i32) -> (i32, i32) {
    %c0_i32 = arith.constant 0 : i32
    return %arg0, %arg2 : i32, i32
  }
  func.func @transform_1(%arg0: i32, %arg1: i32, %arg2: i32) -> (i32, i32) {
    %c0_i32 = arith.constant 0 : i32
    return %arg2, %arg1 : i32, i32
  }
  func.func @transform_2(%arg0: i32, %arg1: i32, %arg2: i32) -> (i32, i32) {
    %c0_i32 = arith.constant 0 : i32
    %c0_i32_0 = arith.constant 0 : i32
    return %c0_i32, %arg1 : i32, i32
  }
  func.func @transform_3(%arg0: i32, %arg1: i32, %arg2: i32) -> (i32, i32) {
    %c0_i32 = arith.constant 0 : i32
    return %arg0, %arg1 : i32, i32
  }
}

</mosaic_0001>

<llo_original>
// kernel: tpu_custom_call.1
$region0: #{tpu_custom_call.1}
  #allocation0 [shape = 'u32[]', space=smem, size = 0x4, offset = 0x4, fixed_abs, tag = 'smem constant byte address 0x4 - core index']
  #allocation1 [shape = 'u32[144,128]{1,0:T(1,128)}', space=vmem, size = 0x12000, scoped, tag = 'internal scratch']
  #allocation2 [shape = 'f32[72,512]{1,0:T(8,128)}', space=vmem, size = 0x24000, scoped, tag = 'scratch operand']
  %s0 = inlined_call_operand.hbm [shape: bf16[72,128], index: 0, kind: input, shape index: {}]
  %s1 = inlined_call_operand.hbm [shape: bf16[128,512], index: 1, kind: input, shape index: {}]
  %s2 = inlined_call_operand.vmem [shape: f32[1,512], index: 2, kind: input, shape index: {}]
  %s3 = inlined_call_operand.hbm [shape: bf16[72,512], index: 3, kind: output, shape index: {}]
  %s4 = sld [smem:[#allocation0]]
  $region38: #{tpu_custom_call.1} parent=0
    _
  %s6 = ssub.s32 1, %s4
  %s7 = scalar_select 0, %s6, %s4
  $region1: #{tpu_custom_call.1} parent=0
    #allocation3 [shape = 'u8[18432]{0}', space=vmem, size = 0x4800, scoped, tag = 'input window, operand 0, single buffered']
    #allocation4 [shape = 's32[1]{0}', space=sflag, size = 0x4, scoped, tag = 'scoped memory for tpu_custom_call.1']
    #allocation5 [shape = 's32[1]{0}', space=sflag, size = 0x4, scoped, tag = 'scoped memory for tpu_custom_call.1']
    #allocation6 [shape = 'u8[131072]{0}', space=vmem, size = 0x20000, scoped, tag = 'input window, operand 1, single buffered']
    #allocation7 [shape = 's32[1]{0}', space=sflag, size = 0x4, scoped, tag = 'scoped memory for tpu_custom_call.1']
    #allocation8 [shape = 'u8[73728]{0}', space=vmem, size = 0x12000, scoped, tag = 'output window, operand 0, single buffered']
    %8 = vsyncpa [#allocation4], 0
    %9 = vsyncpa [#allocation7], 0
    %10 = vsyncpa [#allocation5], 0
    // Predicated region
    $region2: #{tpu_custom_call.1} parent=1 // pred_check
      _
    $region3: #{tpu_custom_call.1} parent=1 // pred_check_branch
      %12 = sbr.rel (0) target = $region5
    $region4: #{tpu_custom_call.1} parent=1 // pred_region
      %s14 = ssub.s32 576, 576
      %15 = vsyncadd [#allocation4], %s14
      %s16 = sshll.u32 [#allocation3], 4
      %s17 = int_to_ptr.vmem [resolvable:$true] %s16
      %22 = dma.hbm_to_vmem [thread:$0]  %s0, 576, %s17, [#allocation4], 64, 64, 4
    $region5: #{tpu_custom_call.1} parent=1 // pred_fallthru
      _
    // Predicated region
    $region6: #{tpu_custom_call.1} parent=1 // pred_check
      _
    $region7: #{tpu_custom_call.1} parent=1 // pred_check_branch
      %24 = sbr.rel (0) target = $region9
    $region8: #{tpu_custom_call.1} parent=1 // pred_region
      %s26 = ssub.s32 4096, 4096
      %27 = vsyncadd [#allocation7], %s26
      %s28 = sshll.u32 [#allocation6], 4
      %s29 = int_to_ptr.vmem [resolvable:$true] %s28
      %34 = dma.hbm_to_vmem [thread:$0]  %s1, 4096, %s29, [#allocation7], 256, 256, 16
    $region9: #{tpu_custom_call.1} parent=1 // pred_fallthru
      _
    // Predicated region
    $region10: #{tpu_custom_call.1} parent=1 // pred_check
      _
    $region11: #{tpu_custom_call.1} parent=1 // pred_check_branch
      %36 = sbr.rel (0) target = $region13
    $region12: #{tpu_custom_call.1} parent=1 // pred_region
      _
    $region13: #{tpu_custom_call.1} parent=1 // pred_fallthru
      _
    // Predicated region
    $region14: #{tpu_custom_call.1} parent=1 // pred_check
      _
    $region15: #{tpu_custom_call.1} parent=1 // pred_check_branch
      %38 = sbr.rel (0) target = $region17
    $region16: #{tpu_custom_call.1} parent=1 // pred_region
      %39 = dma.done [#allocation4], 576
    $region17: #{tpu_custom_call.1} parent=1 // pred_fallthru
      _
    // Predicated region
    $region18: #{tpu_custom_call.1} parent=1 // pred_check
      _
    $region19: #{tpu_custom_call.1} parent=1 // pred_check_branch
      %41 = sbr.rel (0) target = $region21
    $region20: #{tpu_custom_call.1} parent=1 // pred_region
      %42 = dma.done [#allocation7], 4096
    $region21: #{tpu_custom_call.1} parent=1 // pred_fallthru
      _
    %p44 = scmp.eq.s32.totalorder 0, 0
    // Predicated region
    $region22: #{tpu_custom_call.1} parent=1 // pred_check
      %p45 = pneg %p44
    $region23: #{tpu_custom_call.1} parent=1 // pred_check_branch
      %47 = sbr.rel (%p45) target = $region25
    $region24: #{tpu_custom_call.1} parent=1 // pred_region
      %48 = vst [vmem:[#allocation2] sm:$0xff] 0.0
      %49 = vst [vmem:[#allocation2 + $0x8] sm:$0xff] 0.0
      %50 = vst [vmem:[#allocation2 + $0x10] sm:$0xff] 0.0
      %51 = vst [vmem:[#allocation2 + $0x18] sm:$0xff] 0.0
      %52 = vst [vmem:[#allocation2 + $0x20] sm:$0xff] 0.0
      %53 = vst [vmem:[#allocation2 + $0x28] sm:$0xff] 0.0
      %54 = vst [vmem:[#allocation2 + $0x30] sm:$0xff] 0.0
      %55 = vst [vmem:[#allocation2 + $0x38] sm:$0xff] 0.0
      %56 = vst [vmem:[#allocation2 + $0x40] sm:$0xff] 0.0
      %57 = vst [vmem:[#allocation2 + $0x48] sm:$0xff] 0.0
      %58 = vst [vmem:[#allocation2 + $0x50] sm:$0xff] 0.0
      %59 = vst [vmem:[#allocation2 + $0x58] sm:$0xff] 0.0
      %60 = vst [vmem:[#allocation2 + $0x60] sm:$0xff] 0.0
      %61 = vst [vmem:[#allocation2 + $0x68] sm:$0xff] 0.0
      %62 = vst [vmem:[#allocation2 + $0x70] sm:$0xff] 0.0
      %63 = vst [vmem:[#allocation2 + $0x78] sm:$0xff] 0.0
      %64 = vst [vmem:[#allocation2 + $0x80] sm:$0xff] 0.0
      %65 = vst [vmem:[#allocation2 + $0x88] sm:$0xff] 0.0
      %66 = vst [vmem:[#allocation2 + $0x90] sm:$0xff] 0.0
      %67 = vst [vmem:[#allocation2 + $0x98] sm:$0xff] 0.0
      %68 = vst [vmem:[#allocation2 + $0xa0] sm:$0xff] 0.0
      %69 = vst [vmem:[#allocation2 + $0xa8] sm:$0xff] 0.0
      %70 = vst [vmem:[#allocation2 + $0xb0] sm:$0xff] 0.0
      %71 = vst [vmem:[#allocation2 + $0xb8] sm:$0xff] 0.0
      %72 = vst [vmem:[#allocation2 + $0xc0] sm:$0xff] 0.0
      %73 = vst [vmem:[#allocation2 + $0xc8] sm:$0xff] 0.0
      %74 = vst [vmem:[#allocation2 + $0xd0] sm:$0xff] 0.0
      %75 = vst [vmem:[#allocation2 + $0xd8] sm:$0xff] 0.0
      %76 = vst [vmem:[#allocation2 + $0xe0] sm:$0xff] 0.0
      %77 = vst [vmem:[#allocation2 + $0xe8] sm:$0xff] 0.0
      %78 = vst [vmem:[#allocation2 + $0xf0] sm:$0xff] 0.0
      %79 = vst [vmem:[#allocation2 + $0xf8] sm:$0xff] 0.0
      %80 = vst [vmem:[#allocation2 + $0x100] sm:$0xff] 0.0
      %81 = vst [vmem:[#allocation2 + $0x108] sm:$0xff] 0.0
      %82 = vst [vmem:[#allocation2 + $0x110] sm:$0xff] 0.0
      %83 = vst [vmem:[#allocation2 + $0x118] sm:$0xff] 0.0
    $region25: #{tpu_custom_call.1} parent=1 // pred_fallthru
      _
    %v84 = vld [vmem:[#allocation2] sm:$0xff]
    %v85 = vld [vmem:[#allocation2 + $0x8] sm:$0xff]
    %v86 = vld [vmem:[#allocation2 + $0x10] sm:$0xff]
    %v87 = vld [vmem:[#allocation2 + $0x18] sm:$0xff]
    %v88 = vld [vmem:[#allocation2 + $0x20] sm:$0xff]
    %v89 = vld [vmem:[#allocation2 + $0x28] sm:$0xff]
    %v90 = vld [vmem:[#allocation2 + $0x30] sm:$0xff]
    %v91 = vld [vmem:[#allocation2 + $0x38] sm:$0xff]
    %v92 = vld [vmem:[#allocation2 + $0x40] sm:$0xff]
    %v93 = vld [vmem:[#allocation2 + $0x48] sm:$0xff]
    %v94 = vld [vmem:[#allocation2 + $0x50] sm:$0xff]
    %v95 = vld [vmem:[#allocation2 + $0x58] sm:$0xff]
    %v96 = vld [vmem:[#allocation2 + $0x60] sm:$0xff]
    %v97 = vld [vmem:[#allocation2 + $0x68] sm:$0xff]
    %v98 = vld [vmem:[#allocation2 + $0x70] sm:$0xff]
    %v99 = vld [vmem:[#allocation2 + $0x78] sm:$0xff]
    %v100 = vld [vmem:[#allocation2 + $0x80] sm:$0xff]
    %v101 = vld [vmem:[#allocation2 + $0x88] sm:$0xff]
    %v102 = vld [vmem:[#allocation2 + $0x90] sm:$0xff]
    %v103 = vld [vmem:[#allocation2 + $0x98] sm:$0xff]
    %v104 = vld [vmem:[#allocation2 + $0xa0] sm:$0xff]
    %v105 = vld [vmem:[#allocation2 + $0xa8] sm:$0xff]
    %v106 = vld [vmem:[#allocation2 + $0xb0] sm:$0xff]
    %v107 = vld [vmem:[#allocation2 + $0xb8] sm:$0xff]
    %v108 = vld [vmem:[#allocation2 + $0xc0] sm:$0xff]
    %v109 = vld [vmem:[#allocation2 + $0xc8] sm:$0xff]
    %v110 = vld [vmem:[#allocation2 + $0xd0] sm:$0xff]
    %v111 = vld [vmem:[#allocation2 + $0xd8] sm:$0xff]
    %v112 = vld [vmem:[#allocation2 + $0xe0] sm:$0xff]
    %v113 = vld [vmem:[#allocation2 + $0xe8] sm:$0xff]
    %v114 = vld [vmem:[#allocation2 + $0xf0] sm:$0xff]
    %v115 = vld [vmem:[#allocation2 + $0xf8] sm:$0xff]
    %v116 = vld [vmem:[#allocation2 + $0x100] sm:$0xff]
    %v117 = vld [vmem:[#allocation2 + $0x108] sm:$0xff]
    %v118 = vld [vmem:[#allocation2 + $0x110] sm:$0xff]
    %v119 = vld [vmem:[#allocation2 + $0x118] sm:$0xff]
    %v120 = vld [vmem:[#allocation3] sm:$0xf]
    %v121 = vld [vmem:[#allocation3 + $0x4] sm:$0xf]
    %v122 = vld [vmem:[#allocation3 + $0x8] sm:$0xf]
    %v123 = vld [vmem:[#allocation3 + $0xc] sm:$0xf]
    %v124 = vld [vmem:[#allocation3 + $0x10] sm:$0xf]
    %v125 = vld [vmem:[#allocation3 + $0x14] sm:$0xf]
    %v126 = vld [vmem:[#allocation3 + $0x18] sm:$0xf]
    %v127 = vld [vmem:[#allocation3 + $0x1c] sm:$0xf]
    %v128 = vld [vmem:[#allocation3 + $0x20] sm:$0xf]
    %v129 = vld [vmem:[#allocation6] sm:$0xff]
    %v130 = vld [vmem:[#allocation6 + $0x8] sm:$0xff]
    %v131 = vld [vmem:[#allocation6 + $0x10] sm:$0xff]
    %v132 = vld [vmem:[#allocation6 + $0x18] sm:$0xff]
    %v133 = vld [vmem:[#allocation6 + $0x20] sm:$0xff]
    %v134 = vld [vmem:[#allocation6 + $0x28] sm:$0xff]
    %v135 = vld [vmem:[#allocation6 + $0x30] sm:$0xff]
    %v136 = vld [vmem:[#allocation6 + $0x38] sm:$0xff]
    %v137 = vld [vmem:[#allocation6 + $0x40] sm:$0xff]
    %v138 = vld [vmem:[#allocation6 + $0x48] sm:$0xff]
    %v139 = vld [vmem:[#allocation6 + $0x50] sm:$0xff]
    %v140 = vld [vmem:[#allocation6 + $0x58] sm:$0xff]
    %v141 = vld [vmem:[#allocation6 + $0x60] sm:$0xff]
    %v142 = vld [vmem:[#allocation6 + $0x68] sm:$0xff]
    %v143 = vld [vmem:[#allocation6 + $0x70] sm:$0xff]
    %v144 = vld [vmem:[#allocation6 + $0x78] sm:$0xff]
    %v145 = vld [vmem:[#allocation6 + $0x80] sm:$0xff]
    %v146 = vld [vmem:[#allocation6 + $0x88] sm:$0xff]
    %v147 = vld [vmem:[#allocation6 + $0x90] sm:$0xff]
    %v148 = vld [vmem:[#allocation6 + $0x98] sm:$0xff]
    %v149 = vld [vmem:[#allocation6 + $0xa0] sm:$0xff]
    %v150 = vld [vmem:[#allocation6 + $0xa8] sm:$0xff]
    %v151 = vld [vmem:[#allocation6 + $0xb0] sm:$0xff]
    %v152 = vld [vmem:[#allocation6 + $0xb8] sm:$0xff]
    %v153 = vld [vmem:[#allocation6 + $0xc0] sm:$0xff]
    %v154 = vld [vmem:[#allocation6 + $0xc8] sm:$0xff]
    %v155 = vld [vmem:[#allocation6 + $0xd0] sm:$0xff]
    %v156 = vld [vmem:[#allocation6 + $0xd8] sm:$0xff]
    %v157 = vld [vmem:[#allocation6 + $0xe0] sm:$0xff]
    %v158 = vld [vmem:[#allocation6 + $0xe8] sm:$0xff]
    %v159 = vld [vmem:[#allocation6 + $0xf0] sm:$0xff]
    %v160 = vld [vmem:[#allocation6 + $0xf8] sm:$0xff]
    %v170 = vunpack.c.l.b16 %v120
    %v171 = vunpack.c.l.b16 %v121
    %v172 = vunpack.c.l.b16 %v122
    %v173 = vunpack.c.l.b16 %v123
    %v174 = vunpack.c.l.b16 %v124
    %v175 = vunpack.c.l.b16 %v125
    %v176 = vunpack.c.l.b16 %v126
    %v177 = vunpack.c.l.b16 %v127
    %v178 = vunpack.c.l.b16 %v128
    %v179 = vpack.c.b16 %v171, %v170
    %v180 = vpack.c.b16 %v173, %v172
    %v181 = vpack.c.b16 %v175, %v174
    %v182 = vpack.c.b16 %v177, %v176
    %v183 = vpack.c.b16 %v178, %v178
    %v221 = vunpack.c.l.b16 %v129
    %v222 = vunpack.c.h.b16 %v129
    %v223 = vunpack.c.l.b16 %v130
    %v224 = vunpack.c.h.b16 %v130
    %v225 = vunpack.c.l.b16 %v131
    %v226 = vunpack.c.h.b16 %v131
    %v227 = vunpack.c.l.b16 %v132
    %v228 = vunpack.c.h.b16 %v132
    %v229 = vunpack.c.l.b16 %v133
    %v230 = vunpack.c.h.b16 %v133
    %v231 = vunpack.c.l.b16 %v134
    %v232 = vunpack.c.h.b16 %v134
    %v233 = vunpack.c.l.b16 %v135
    %v234 = vunpack.c.h.b16 %v135
    %v235 = vunpack.c.l.b16 %v136
    %v236 = vunpack.c.h.b16 %v136
    %v237 = vunpack.c.l.b16 %v137
    %v238 = vunpack.c.h.b16 %v137
    %v239 = vunpack.c.l.b16 %v138
    %v240 = vunpack.c.h.b16 %v138
    %v241 = vunpack.c.l.b16 %v139
    %v242 = vunpack.c.h.b16 %v139
    %v243 = vunpack.c.l.b16 %v140
    %v244 = vunpack.c.h.b16 %v140
    %v245 = vunpack.c.l.b16 %v141
    %v246 = vunpack.c.h.b16 %v141
    %v247 = vunpack.c.l.b16 %v142
    %v248 = vunpack.c.h.b16 %v142
    %v249 = vunpack.c.l.b16 %v143
    %v250 = vunpack.c.h.b16 %v143
    %v251 = vunpack.c.l.b16 %v144
    %v252 = vunpack.c.h.b16 %v144
    %v253 = vunpack.c.l.b16 %v145
    %v254 = vunpack.c.h.b16 %v145
    %v255 = vunpack.c.l.b16 %v146
    %v256 = vunpack.c.h.b16 %v146
    %v257 = vunpack.c.l.b16 %v147
    %v258 = vunpack.c.h.b16 %v147
    %v259 = vunpack.c.l.b16 %v148
    %v260 = vunpack.c.h.b16 %v148
    %v261 = vunpack.c.l.b16 %v149
    %v262 = vunpack.c.h.b16 %v149
    %v263 = vunpack.c.l.b16 %v150
    %v264 = vunpack.c.h.b16 %v150
    %v265 = vunpack.c.l.b16 %v151
    %v266 = vunpack.c.h.b16 %v151
    %v267 = vunpack.c.l.b16 %v152
    %v268 = vunpack.c.h.b16 %v152
    %v269 = vunpack.c.l.b16 %v153
    %v270 = vunpack.c.h.b16 %v153
    %v271 = vunpack.c.l.b16 %v154
    %v272 = vunpack.c.h.b16 %v154
    %v273 = vunpack.c.l.b16 %v155
    %v274 = vunpack.c.h.b16 %v155
    %v275 = vunpack.c.l.b16 %v156
    %v276 = vunpack.c.h.b16 %v156
    %v277 = vunpack.c.l.b16 %v157
    %v278 = vunpack.c.h.b16 %v157
    %v279 = vunpack.c.l.b16 %v158
    %v280 = vunpack.c.h.b16 %v158
    %v281 = vunpack.c.l.b16 %v159
    %v282 = vunpack.c.h.b16 %v159
    %v283 = vunpack.c.l.b16 %v160
    %v284 = vunpack.c.h.b16 %v160
    %v285 = vpack.c.b16 %v225, %v221
    %v286 = vpack.c.b16 %v226, %v222
    %v287 = vpack.c.b16 %v227, %v223
    %v288 = vpack.c.b16 %v228, %v224
    %v289 = vpack.c.b16 %v233, %v229
    %v290 = vpack.c.b16 %v234, %v230
    %v291 = vpack.c.b16 %v235, %v231
    %v292 = vpack.c.b16 %v236, %v232
    %v293 = vpack.c.b16 %v241, %v237
    %v294 = vpack.c.b16 %v242, %v238
    %v295 = vpack.c.b16 %v243, %v239
    %v296 = vpack.c.b16 %v244, %v240
    %v297 = vpack.c.b16 %v249, %v245
    %v298 = vpack.c.b16 %v250, %v246
    %v299 = vpack.c.b16 %v251, %v247
    %v300 = vpack.c.b16 %v252, %v248
    %v301 = vpack.c.b16 %v257, %v253
    %v302 = vpack.c.b16 %v258, %v254
    %v303 = vpack.c.b16 %v259, %v255
    %v304 = vpack.c.b16 %v260, %v256
    %v305 = vpack.c.b16 %v265, %v261
    %v306 = vpack.c.b16 %v266, %v262
    %v307 = vpack.c.b16 %v267, %v263
    %v308 = vpack.c.b16 %v268, %v264
    %v309 = vpack.c.b16 %v273, %v269
    %v310 = vpack.c.b16 %v274, %v270
    %v311 = vpack.c.b16 %v275, %v271
    %v312 = vpack.c.b16 %v276, %v272
    %v313 = vpack.c.b16 %v281, %v277
    %v314 = vpack.c.b16 %v282, %v278
    %v315 = vpack.c.b16 %v283, %v279
    %v316 = vpack.c.b16 %v284, %v280
    %349 = vmatprep.subr.bf16.mxu0 %v286
    %350 = vmatpush1.bf16.msra.mxu0 %v285
    %351 = vmatprep.subr.bf16.mxu0 %v290
    %352 = vmatpush1.bf16.msra.mxu0 %v289
    %353 = vmatprep.subr.bf16.mxu0 %v294
    %354 = vmatpush1.bf16.msra.mxu0 %v293
    %355 = vmatprep.subr.bf16.mxu0 %v298
    %356 = vmatpush1.bf16.msra.mxu0 %v297
    %357 = vmatprep.subr.bf16.mxu0 %v302
    %358 = vmatpush1.bf16.msra.mxu0 %v301
    %359 = vmatprep.subr.bf16.mxu0 %v306
    %360 = vmatpush1.bf16.msra.mxu0 %v305
    %361 = vmatprep.subr.bf16.mxu0 %v310
    %362 = vmatpush1.bf16.msra.mxu0 %v309
    %363 = vmatprep.subr.bf16.mxu0 %v314
    %364 = vmatpush1.bf16.msra.mxu0 %v313
    %365 = vmatprep.subr.bf16.mxu0 0
    %366 = vmatpush1.bf16.msra.mxu0 0
    %367 = vmatprep.subr.bf16.mxu0 0
    %368 = vmatpush1.bf16.msra.mxu0 0
    %369 = vmatprep.subr.bf16.mxu0 0
    %370 = vmatpush1.bf16.msra.mxu0 0
    %371 = vmatprep.subr.bf16.mxu0 0
    %372 = vmatpush1.bf16.msra.mxu0 0
    %373 = vmatprep.subr.bf16.mxu0 0
    %374 = vmatpush1.bf16.msra.mxu0 0
    %375 = vmatprep.subr.bf16.mxu0 0
    %376 = vmatpush1.bf16.msra.mxu0 0
    %377 = vmatprep.subr.bf16.mxu0 0
    %378 = vmatpush1.bf16.msra.mxu0 0
    %379 = vmatprep.subr.bf16.mxu0 0
    %380 = vmatpush1.bf16.msra.mxu0 0
    %381 = vmatprep.mubr.bf16.mxu0 0
    %382 = vmatmul.mubr.bf16.gmra.mrb[0].mxu0 %v179
    %v383 = vpop.f32.mrb[0].mxu0
    %v384 = vadd.f32 0.0, %v383
    %v385 = vpop.f32.mrb[0].mxu0
    %v386 = vadd.f32 0.0, %v385
    %v387 = vpop.f32.mrb[0].mxu0
    %v388 = vadd.f32 0.0, %v387
    %v389 = vpop.f32.mrb[0].mxu0
    %v390 = vadd.f32 0.0, %v389
    %391 = vmatprep.mubr.bf16.mxu0 0
    %392 = vmatmul.mubr.bf16.gmra.mrb[0].mxu0 %v180
    %v393 = vpop.f32.mrb[0].mxu0
    %v394 = vadd.f32 0.0, %v393
    %v395 = vpop.f32.mrb[0].mxu0
    %v396 = vadd.f32 0.0, %v395
    %v397 = vpop.f32.mrb[0].mxu0
    %v398 = vadd.f32 0.0, %v397
    %v399 = vpop.f32.mrb[0].mxu0
    %v400 = vadd.f32 0.0, %v399
    %401 = vmatprep.mubr.bf16.mxu0 0
    %402 = vmatmul.mubr.bf16.gmra.mrb[0].mxu0 %v181
    %v403 = vpop.f32.mrb[0].mxu0
    %v404 = vadd.f32 0.0, %v403
    %v405 = vpop.f32.mrb[0].mxu0
    %v406 = vadd.f32 0.0, %v405
    %v407 = vpop.f32.mrb[0].mxu0
    %v408 = vadd.f32 0.0, %v407
    %v409 = vpop.f32.mrb[0].mxu0
    %v410 = vadd.f32 0.0, %v409
    %411 = vmatprep.mubr.bf16.mxu0 0
    %412 = vmatmul.mubr.bf16.gmra.mrb[0].mxu0 %v182
    %v413 = vpop.f32.mrb[0].mxu0
    %v414 = vadd.f32 0.0, %v413
    %v415 = vpop.f32.mrb[0].mxu0
    %v416 = vadd.f32 0.0, %v415
    %v417 = vpop.f32.mrb[0].mxu0
    %v418 = vadd.f32 0.0, %v417
    %v419 = vpop.f32.mrb[0].mxu0
    %v420 = vadd.f32 0.0, %v419
    %421 = vmatprep.mubr.bf16.mxu0 0
    %422 = vmatmul.mubr.bf16.gmra.mrb[0].mxu0 %v183
    %v423 = vpop.f32.mrb[0].mxu0
    %v424 = vadd.f32 0.0, %v423
    %v425 = vpop.f32.mrb[0].mxu0
    %v426 = vadd.f32 0.0, %v425
    %v427 = vpop.f32.mrb[0].mxu0
    %v428 = vpop.f32.mrb[0].mxu0
    %429 = vdwg.mxu0
    %430 = vmatprep.subr.bf16.mxu0 %v288
    %431 = vmatpush1.bf16.msra.mxu0 %v287
    %432 = vmatprep.subr.bf16.mxu0 %v292
    %433 = vmatpush1.bf16.msra.mxu0 %v291
    %434 = vmatprep.subr.bf16.mxu0 %v296
    %435 = vmatpush1.bf16.msra.mxu0 %v295
    %436 = vmatprep.subr.bf16.mxu0 %v300
    %437 = vmatpush1.bf16.msra.mxu0 %v299
    %438 = vmatprep.subr.bf16.mxu0 %v304
    %439 = vmatpush1.bf16.msra.mxu0 %v303
    %440 = vmatprep.subr.bf16.mxu0 %v308
    %441 = vmatpush1.bf16.msra.mxu0 %v307
    %442 = vmatprep.subr.bf16.mxu0 %v312
    %443 = vmatpush1.bf16.msra.mxu0 %v311
    %444 = vmatprep.subr.bf16.mxu0 %v316
    %445 = vmatpush1.bf16.msra.mxu0 %v315
    %446 = vmatprep.subr.bf16.mxu0 0
    %447 = vmatpush1.bf16.msra.mxu0 0
    %448 = vmatprep.subr.bf16.mxu0 0
    %449 = vmatpush1.bf16.msra.mxu0 0
    %450 = vmatprep.subr.bf16.mxu0 0
    %451 = vmatpush1.bf16.msra.mxu0 0
    %452 = vmatprep.subr.bf16.mxu0 0
    %453 = vmatpush1.bf16.msra.mxu0 0
    %454 = vmatprep.subr.bf16.mxu0 0
    %455 = vmatpush1.bf16.msra.mxu0 0
    %456 = vmatprep.subr.bf16.mxu0 0
    %457 = vmatpush1.bf16.msra.mxu0 0
    %458 = vmatprep.subr.bf16.mxu0 0
    %459 = vmatpush1.bf16.msra.mxu0 0
    %460 = vmatprep.subr.bf16.mxu0 0
    %461 = vmatpush1.bf16.msra.mxu0 0
    %462 = vmatprep.mubr.bf16.mxu0 0
    %463 = vmatmul.mubr.bf16.gmra.mrb[0].mxu0 %v179
    %v464 = vpop.f32.mrb[0].mxu0
    %v465 = vadd.f32 0.0, %v464
    %v466 = vpop.f32.mrb[0].mxu0
    %v467 = vadd.f32 0.0, %v466
    %v468 = vpop.f32.mrb[0].mxu0
    %v469 = vadd.f32 0.0, %v468
    %v470 = vpop.f32.mrb[0].mxu0
    %v471 = vadd.f32 0.0, %v470
    %472 = vmatprep.mubr.bf16.mxu0 0
    %473 = vmatmul.mubr.bf16.gmra.mrb[0].mxu0 %v180
    %v474 = vpop.f32.mrb[0].mxu0
    %v475 = vadd.f32 0.0, %v474
    %v476 = vpop.f32.mrb[0].mxu0
    %v477 = vadd.f32 0.0, %v476
    %v478 = vpop.f32.mrb[0].mxu0
    %v479 = vadd.f32 0.0, %v478
    %v480 = vpop.f32.mrb[0].mxu0
    %v481 = vadd.f32 0.0, %v480
    %482 = vmatprep.mubr.bf16.mxu0 0
    %483 = vmatmul.mubr.bf16.gmra.mrb[0].mxu0 %v181
    %v484 = vpop.f32.mrb[0].mxu0
    %v485 = vadd.f32 0.0, %v484
    %v486 = vpop.f32.mrb[0].mxu0
    %v487 = vadd.f32 0.0, %v486
    %v488 = vpop.f32.mrb[0].mxu0
    %v489 = vadd.f32 0.0, %v488
    %v490 = vpop.f32.mrb[0].mxu0
    %v491 = vadd.f32 0.0, %v490
    %492 = vmatprep.mubr.bf16.mxu0 0
    %493 = vmatmul.mubr.bf16.gmra.mrb[0].mxu0 %v182
    %v494 = vpop.f32.mrb[0].mxu0
    %v495 = vadd.f32 0.0, %v494
    %v496 = vpop.f32.mrb[0].mxu0
    %v497 = vadd.f32 0.0, %v496
    %v498 = vpop.f32.mrb[0].mxu0
    %v499 = vadd.f32 0.0, %v498
    %v500 = vpop.f32.mrb[0].mxu0
    %v501 = vadd.f32 0.0, %v500
    %502 = vmatprep.mubr.bf16.mxu0 0
    %503 = vmatmul.mubr.bf16.gmra.mrb[0].mxu0 %v183
    %v504 = vpop.f32.mrb[0].mxu0
    %v505 = vadd.f32 0.0, %v504
    %v506 = vpop.f32.mrb[0].mxu0
    %v507 = vadd.f32 0.0, %v506
    %v508 = vpop.f32.mrb[0].mxu0
    %v509 = vpop.f32.mrb[0].mxu0
    %510 = vdwg.mxu0
    %v511 = vadd.f32 %v84, %v384
    %v512 = vadd.f32 %v85, %v386
    %v513 = vadd.f32 %v86, %v465
    %v514 = vadd.f32 %v87, %v467
    %v515 = vadd.f32 %v88, %v388
    %v516 = vadd.f32 %v89, %v390
    %v517 = vadd.f32 %v90, %v469
    %v518 = vadd.f32 %v91, %v471
    %v519 = vadd.f32 %v92, %v394
    %v520 = vadd.f32 %v93, %v396
    %v521 = vadd.f32 %v94, %v475
    %v522 = vadd.f32 %v95, %v477
    %v523 = vadd.f32 %v96, %v398
    %v524 = vadd.f32 %v97, %v400
    %v525 = vadd.f32 %v98, %v479
    %v526 = vadd.f32 %v99, %v481
    %v527 = vadd.f32 %v100, %v404
    %v528 = vadd.f32 %v101, %v406
    %v529 = vadd.f32 %v102, %v485
    %v530 = vadd.f32 %v103, %v487
    %v531 = vadd.f32 %v104, %v408
    %v532 = vadd.f32 %v105, %v410
    %v533 = vadd.f32 %v106, %v489
    %v534 = vadd.f32 %v107, %v491
    %v535 = vadd.f32 %v108, %v414
    %v536 = vadd.f32 %v109, %v416
    %v537 = vadd.f32 %v110, %v495
    %v538 = vadd.f32 %v111, %v497
    %v539 = vadd.f32 %v112, %v418
    %v540 = vadd.f32 %v113, %v420
    %v541 = vadd.f32 %v114, %v499
    %v542 = vadd.f32 %v115, %v501
    %v543 = vadd.f32 %v116, %v424
    %v544 = vadd.f32 %v117, %v426
    %v545 = vadd.f32 %v118, %v505
    %v546 = vadd.f32 %v119, %v507
    %547 = vst [vmem:[#allocation2] sm:$0xff] %v511
    %548 = vst [vmem:[#allocation2 + $0x8] sm:$0xff] %v512
    %549 = vst [vmem:[#allocation2 + $0x10] sm:$0xff] %v513
    %550 = vst [vmem:[#allocation2 + $0x18] sm:$0xff] %v514
    %551 = vst [vmem:[#allocation2 + $0x20] sm:$0xff] %v515
    %552 = vst [vmem:[#allocation2 + $0x28] sm:$0xff] %v516
    %553 = vst [vmem:[#allocation2 + $0x30] sm:$0xff] %v517
    %554 = vst [vmem:[#allocation2 + $0x38] sm:$0xff] %v518
    %555 = vst [vmem:[#allocation2 + $0x40] sm:$0xff] %v519
    %556 = vst [vmem:[#allocation2 + $0x48] sm:$0xff] %v520
    %557 = vst [vmem:[#allocation2 + $0x50] sm:$0xff] %v521
    %558 = vst [vmem:[#allocation2 + $0x58] sm:$0xff] %v522
    %559 = vst [vmem:[#allocation2 + $0x60] sm:$0xff] %v523
    %560 = vst [vmem:[#allocation2 + $0x68] sm:$0xff] %v524
    %561 = vst [vmem:[#allocation2 + $0x70] sm:$0xff] %v525
    %562 = vst [vmem:[#allocation2 + $0x78] sm:$0xff] %v526
    %563 = vst [vmem:[#allocation2 + $0x80] sm:$0xff] %v527
    %564 = vst [vmem:[#allocation2 + $0x88] sm:$0xff] %v528
    %565 = vst [vmem:[#allocation2 + $0x90] sm:$0xff] %v529
    %566 = vst [vmem:[#allocation2 + $0x98] sm:$0xff] %v530
    %567 = vst [vmem:[#allocation2 + $0xa0] sm:$0xff] %v531
    %568 = vst [vmem:[#allocation2 + $0xa8] sm:$0xff] %v532
    %569 = vst [vmem:[#allocation2 + $0xb0] sm:$0xff] %v533
    %570 = vst [vmem:[#allocation2 + $0xb8] sm:$0xff] %v534
    %571 = vst [vmem:[#allocation2 + $0xc0] sm:$0xff] %v535
    %572 = vst [vmem:[#allocation2 + $0xc8] sm:$0xff] %v536
    %573 = vst [vmem:[#allocation2 + $0xd0] sm:$0xff] %v537
    %574 = vst [vmem:[#allocation2 + $0xd8] sm:$0xff] %v538
    %575 = vst [vmem:[#allocation2 + $0xe0] sm:$0xff] %v539
    %576 = vst [vmem:[#allocation2 + $0xe8] sm:$0xff] %v540
    %577 = vst [vmem:[#allocation2 + $0xf0] sm:$0xff] %v541
    %578 = vst [vmem:[#allocation2 + $0xf8] sm:$0xff] %v542
    %579 = vst [vmem:[#allocation2 + $0x100] sm:$0xff] %v543
    %580 = vst [vmem:[#allocation2 + $0x108] sm:$0xff] %v544
    %581 = vst [vmem:[#allocation2 + $0x110] sm:$0xff] %v545
    %582 = vst [vmem:[#allocation2 + $0x118] sm:$0xff] %v546
    // Predicated region
    $region26: #{tpu_custom_call.1} parent=1 // pred_check
      %p583 = pneg %p44
    $region27: #{tpu_custom_call.1} parent=1 // pred_check_branch
      %585 = sbr.rel (%p583) target = $region29
    $region28: #{tpu_custom_call.1} parent=1 // pred_region
      %v586 = vld [vmem:[#allocation2] sm:$0xff]
      %v587 = vld [vmem:[#allocation2 + $0x8] sm:$0xff]
      %v588 = vld [vmem:[#allocation2 + $0x10] sm:$0xff]
      %v589 = vld [vmem:[#allocation2 + $0x18] sm:$0xff]
      %v590 = vld [vmem:[#allocation2 + $0x20] sm:$0xff]
      %v591 = vld [vmem:[#allocation2 + $0x28] sm:$0xff]
      %v592 = vld [vmem:[#allocation2 + $0x30] sm:$0xff]
      %v593 = vld [vmem:[#allocation2 + $0x38] sm:$0xff]
      %v594 = vld [vmem:[#allocation2 + $0x40] sm:$0xff]
      %v595 = vld [vmem:[#allocation2 + $0x48] sm:$0xff]
      %v596 = vld [vmem:[#allocation2 + $0x50] sm:$0xff]
      %v597 = vld [vmem:[#allocation2 + $0x58] sm:$0xff]
      %v598 = vld [vmem:[#allocation2 + $0x60] sm:$0xff]
      %v599 = vld [vmem:[#allocation2 + $0x68] sm:$0xff]
      %v600 = vld [vmem:[#allocation2 + $0x70] sm:$0xff]
      %v601 = vld [vmem:[#allocation2 + $0x78] sm:$0xff]
      %v602 = vld [vmem:[#allocation2 + $0x80] sm:$0xff]
      %v603 = vld [vmem:[#allocation2 + $0x88] sm:$0xff]
      %v604 = vld [vmem:[#allocation2 + $0x90] sm:$0xff]
      %v605 = vld [vmem:[#allocation2 + $0x98] sm:$0xff]
      %v606 = vld [vmem:[#allocation2 + $0xa0] sm:$0xff]
      %v607 = vld [vmem:[#allocation2 + $0xa8] sm:$0xff]
      %v608 = vld [vmem:[#allocation2 + $0xb0] sm:$0xff]
      %v609 = vld [vmem:[#allocation2 + $0xb8] sm:$0xff]
      %v610 = vld [vmem:[#allocation2 + $0xc0] sm:$0xff]
      %v611 = vld [vmem:[#allocation2 + $0xc8] sm:$0xff]
      %v612 = vld [vmem:[#allocation2 + $0xd0] sm:$0xff]
      %v613 = vld [vmem:[#allocation2 + $0xd8] sm:$0xff]
      %v614 = vld [vmem:[#allocation2 + $0xe0] sm:$0xff]
      %v615 = vld [vmem:[#allocation2 + $0xe8] sm:$0xff]
      %v616 = vld [vmem:[#allocation2 + $0xf0] sm:$0xff]
      %v617 = vld [vmem:[#allocation2 + $0xf8] sm:$0xff]
      %v618 = vld [vmem:[#allocation2 + $0x100] sm:$0xff]
      %v619 = vld [vmem:[#allocation2 + $0x108] sm:$0xff]
      %v620 = vld [vmem:[#allocation2 + $0x110] sm:$0xff]
      %v621 = vld [vmem:[#allocation2 + $0x118] sm:$0xff]
      %v622 = vld [vmem:[%s2] sm:$0xf]
      %v624 = vlaneseq
      %v625 = vshrl.u32 %v624, 7
      %v626 = vsub.s32 0, %v625
      %v627 = vrot.slane %v622, %v626
      %v628 = vlaneseq
      %v629 = vshrl.u32 %v628, 7
      %v630 = vsub.s32 1, %v629
      %v631 = vrot.slane %v622, %v630
      %v632 = vlaneseq
      %v633 = vshrl.u32 %v632, 7
      %v634 = vsub.s32 2, %v633
      %v635 = vrot.slane %v622, %v634
      %v636 = vlaneseq
      %v637 = vshrl.u32 %v636, 7
      %v638 = vsub.s32 3, %v637
      %v639 = vrot.slane %v622, %v638
      %v644 = vadd.f32 %v586, %v627
      %v645 = vadd.f32 %v587, %v631
      %v646 = vadd.f32 %v588, %v635
      %v647 = vadd.f32 %v589, %v639
      %v648 = vadd.f32 %v590, %v627
      %v649 = vadd.f32 %v591, %v631
      %v650 = vadd.f32 %v592, %v635
      %v651 = vadd.f32 %v593, %v639
      %v652 = vadd.f32 %v594, %v627
      %v653 = vadd.f32 %v595, %v631
      %v654 = vadd.f32 %v596, %v635
      %v655 = vadd.f32 %v597, %v639
      %v656 = vadd.f32 %v598, %v627
      %v657 = vadd.f32 %v599, %v631
      %v658 = vadd.f32 %v600, %v635
      %v659 = vadd.f32 %v601, %v639
      %v660 = vadd.f32 %v602, %v627
      %v661 = vadd.f32 %v603, %v631
      %v662 = vadd.f32 %v604, %v635
      %v663 = vadd.f32 %v605, %v639
      %v664 = vadd.f32 %v606, %v627
      %v665 = vadd.f32 %v607, %v631
      %v666 = vadd.f32 %v608, %v635
      %v667 = vadd.f32 %v609, %v639
      %v668 = vadd.f32 %v610, %v627
      %v669 = vadd.f32 %v611, %v631
      %v670 = vadd.f32 %v612, %v635
      %v671 = vadd.f32 %v613, %v639
      %v672 = vadd.f32 %v614, %v627
      %v673 = vadd.f32 %v615, %v631
      %v674 = vadd.f32 %v616, %v635
      %v675 = vadd.f32 %v617, %v639
      %v676 = vadd.f32 %v618, %v627
      %v677 = vadd.f32 %v619, %v631
      %v678 = vadd.f32 %v620, %v635
      %v679 = vadd.f32 %v621, %v639
      %v680 = vpack.c.bf16 %v648, %v644
      %v681 = vpack.c.bf16 %v649, %v645
      %v682 = vpack.c.bf16 %v650, %v646
      %v683 = vpack.c.bf16 %v651, %v647
      %v684 = vpack.c.bf16 %v656, %v652
      %v685 = vpack.c.bf16 %v657, %v653
      %v686 = vpack.c.bf16 %v658, %v654
      %v687 = vpack.c.bf16 %v659, %v655
      %v688 = vpack.c.bf16 %v664, %v660
      %v689 = vpack.c.bf16 %v665, %v661
      %v690 = vpack.c.bf16 %v666, %v662
      %v691 = vpack.c.bf16 %v667, %v663
      %v692 = vpack.c.bf16 %v672, %v668
      %v693 = vpack.c.bf16 %v673, %v669
      %v694 = vpack.c.bf16 %v674, %v670
      %v695 = vpack.c.bf16 %v675, %v671
      %v696 = vpack.c.bf16 %v676, %v676
      %v697 = vpack.c.bf16 %v677, %v677
      %v698 = vpack.c.bf16 %v678, %v678
      %v699 = vpack.c.bf16 %v679, %v679
      %v720 = vunpack.c.l.b16 %v680
      %v721 = vunpack.c.l.b16 %v681
      %v722 = vunpack.c.l.b16 %v682
      %v723 = vunpack.c.l.b16 %v683
      %v724 = vunpack.c.h.b16 %v680
      %v725 = vunpack.c.h.b16 %v681
      %v726 = vunpack.c.h.b16 %v682
      %v727 = vunpack.c.h.b16 %v683
      %v728 = vunpack.c.l.b16 %v684
      %v729 = vunpack.c.l.b16 %v685
      %v730 = vunpack.c.l.b16 %v686
      %v731 = vunpack.c.l.b16 %v687
      %v732 = vunpack.c.h.b16 %v684
      %v733 = vunpack.c.h.b16 %v685
      %v734 = vunpack.c.h.b16 %v686
      %v735 = vunpack.c.h.b16 %v687
      %v736 = vunpack.c.l.b16 %v688
      %v737 = vunpack.c.l.b16 %v689
      %v738 = vunpack.c.l.b16 %v690
      %v739 = vunpack.c.l.b16 %v691
      %v740 = vunpack.c.h.b16 %v688
      %v741 = vunpack.c.h.b16 %v689
      %v742 = vunpack.c.h.b16 %v690
      %v743 = vunpack.c.h.b16 %v691
      %v744 = vunpack.c.l.b16 %v692
      %v745 = vunpack.c.l.b16 %v693
      %v746 = vunpack.c.l.b16 %v694
      %v747 = vunpack.c.l.b16 %v695
      %v748 = vunpack.c.h.b16 %v692
      %v749 = vunpack.c.h.b16 %v693
      %v750 = vunpack.c.h.b16 %v694
      %v751 = vunpack.c.h.b16 %v695
      %v752 = vunpack.c.l.b16 %v696
      %v753 = vunpack.c.l.b16 %v697
      %v754 = vunpack.c.l.b16 %v698
      %v755 = vunpack.c.l.b16 %v699
      %v756 = vpack.c.b16 %v721, %v720
      %v757 = vpack.c.b16 %v723, %v722
      %v758 = vpack.c.b16 %v725, %v724
      %v759 = vpack.c.b16 %v727, %v726
      %v760 = vpack.c.b16 %v729, %v728
      %v761 = vpack.c.b16 %v731, %v730
      %v762 = vpack.c.b16 %v733, %v732
      %v763 = vpack.c.b16 %v735, %v734
      %v764 = vpack.c.b16 %v737, %v736
      %v765 = vpack.c.b16 %v739, %v738
      %v766 = vpack.c.b16 %v741, %v740
      %v767 = vpack.c.b16 %v743, %v742
      %v768 = vpack.c.b16 %v745, %v744
      %v769 = vpack.c.b16 %v747, %v746
      %v770 = vpack.c.b16 %v749, %v748
      %v771 = vpack.c.b16 %v751, %v750
      %v772 = vpack.c.b16 %v753, %v752
      %v773 = vpack.c.b16 %v755, %v754
      %792 = vst [vmem:[#allocation8] sm:$0xff] %v756
      %793 = vst [vmem:[#allocation8 + $0x8] sm:$0xff] %v757
      %794 = vst [vmem:[#allocation8 + $0x10] sm:$0xff] %v758
      %795 = vst [vmem:[#allocation8 + $0x18] sm:$0xff] %v759
      %796 = vst [vmem:[#allocation8 + $0x20] sm:$0xff] %v760
      %797 = vst [vmem:[#allocation8 + $0x28] sm:$0xff] %v761
      %798 = vst [vmem:[#allocation8 + $0x30] sm:$0xff] %v762
      %799 = vst [vmem:[#allocation8 + $0x38] sm:$0xff] %v763
      %800 = vst [vmem:[#allocation8 + $0x40] sm:$0xff] %v764
      %801 = vst [vmem:[#allocation8 + $0x48] sm:$0xff] %v765
      %802 = vst [vmem:[#allocation8 + $0x50] sm:$0xff] %v766
      %803 = vst [vmem:[#allocation8 + $0x58] sm:$0xff] %v767
      %804 = vst [vmem:[#allocation8 + $0x60] sm:$0xff] %v768
      %805 = vst [vmem:[#allocation8 + $0x68] sm:$0xff] %v769
      %806 = vst [vmem:[#allocation8 + $0x70] sm:$0xff] %v770
      %807 = vst [vmem:[#allocation8 + $0x78] sm:$0xff] %v771
      %808 = vst [vmem:[#allocation8 + $0x80] sm:$0xff] %v772
      %809 = vst [vmem:[#allocation8 + $0x88] sm:$0xff] %v773
    $region29: #{tpu_custom_call.1} parent=1 // pred_fallthru
      _
    // Predicated region
    $region30: #{tpu_custom_call.1} parent=1 // pred_check
      _
    $region31: #{tpu_custom_call.1} parent=1 // pred_check_branch
      %811 = sbr.rel (0) target = $region33
    $region32: #{tpu_custom_call.1} parent=1 // pred_region
      %s813 = ssub.s32 2304, 2304
      %814 = vsyncadd [#allocation5], %s813
      %s815 = sshll.u32 [#allocation8], 4
      %s816 = int_to_ptr.vmem [resolvable:$true] %s815
      %821 = dma.vmem_to_hbm [thread:$0]  %s816, 2304, %s3, [#allocation5], 256, 256, 16
    $region33: #{tpu_custom_call.1} parent=1 // pred_fallthru
      _
    // Predicated region
    $region34: #{tpu_custom_call.1} parent=1 // pred_check
      _
    $region35: #{tpu_custom_call.1} parent=1 // pred_check_branch
      %823 = sbr.rel (0) target = $region37
    $region36: #{tpu_custom_call.1} parent=1 // pred_region
      %824 = dma.done [#allocation5], 2304
    $region37: #{tpu_custom_call.1} parent=1 // pred_fallthru
      _
    %825 = vsyncpa [#allocation4], 1
    %826 = vsyncpa [#allocation7], 1
    %827 = vsyncpa [#allocation5], 1

</llo_original>
